<compile_context>
chip_gen: v5e
topology: v5e:2x2
jax: 0.10.0
libtpu: 0.0.40
codegen_flags: <defaults>
</compile_context>

<pallas_src>
import jax
import jax.numpy as jnp
from jax.experimental import pallas as pl
from jax.experimental.pallas import tpu as pltpu

_MIB = 1024 * 1024


def se_kernel(x_ref, w1_ref, b1_ref, w2_ref, b2_ref, o_ref):
    # x_ref / o_ref: (Bt, C, HW) -- channels on sublanes, spatial on lanes.
    xv = x_ref[...]                                    # single VMEM read, reused

    # --- squeeze: global average pool over spatial (lane) axis, f32 acc ---
    pooled = jnp.mean(xv, axis=-1, dtype=jnp.float32)              # (Bt, C)

    # --- excitation: FC -> ReLU -> FC -> Sigmoid (kept in f32) ---
    h = jnp.dot(pooled, w1_ref[...].astype(jnp.float32),
                preferred_element_type=jnp.float32)
    h = jnp.maximum(h + b1_ref[...].astype(jnp.float32), 0.0)      # (Bt, hidden)
    s = jnp.dot(h, w2_ref[...].astype(jnp.float32),
                preferred_element_type=jnp.float32)
    s = jax.nn.sigmoid(s + b2_ref[...].astype(jnp.float32))        # (Bt, C)

    # --- scale: broadcast per-(b, c) gate across the spatial lanes ---
    gate = s.astype(xv.dtype)[:, :, None]                          # (Bt, C, 1)
    o_ref[...] = (xv * gate).astype(o_ref.dtype)


def _tpu_generation_params():
    """Returns (vmem_budget_bytes, num_tensorcores) for the attached TPU."""
    phys = None
    try:
        phys = int(pltpu.get_tpu_info().vmem_capacity_bytes)
    except Exception:
        phys = None
    if phys is None:
        # Unknown part: conservative budget that fits every generation.
        return 36 * _MIB, 1
    if phys <= 64 * _MIB:
        # v7x class: 64 MiB physical VMEM per core, 2 TensorCores per chip.
        return 36 * _MIB, 2
    # v5e / v6e class: 128 MiB physical VMEM, 1 TensorCore per chip.
    return 96 * _MIB, 1


def _pick_block_batch(B, C, HW, elt_bytes, vmem_budget_bytes, num_tc):
    """Largest divisor Bt of B whose double-buffered in+out footprint fits."""
    per_batch = C * HW * elt_bytes
    # in + out blocks, each double-buffered -> 4 copies; keep ~25% headroom
    # for weights / biases / compiler internal scratch.
    usable = (vmem_budget_bytes * 3) // 4
    if 4 * per_batch > usable:
        # TODO(synk): add an HW-split two-pass fallback (pooled accumulator in
        # scratch + rescale sweep) for feature maps that exceed the VMEM budget.
        raise ValueError(
            f"SE feature map of {per_batch} bytes/batch (C={C}, HW={HW}) does not "
            f"fit the VMEM budget of {vmem_budget_bytes} bytes even with a single "
            "batch element per grid step; HW-split fallback not implemented yet.")
    max_bt = max(1, usable // (4 * per_batch))

    # Step-count policy:
    #   * multi-TC (v7x): >= 2 grid steps per TensorCore when B allows (so each
    #     core's software pipeline can double-buffer), else >= 1 step per TC so
    #     both cores are used.
    #   * single-TC (v5e/v6e): splitting the grid is just a serial loop -- keep
    #     ~3 steps for pipeline overlap when B allows, otherwise fill the budget.
    if num_tc >= 2:
        want_steps = 2 * num_tc if B >= 2 * num_tc else min(B, num_tc)
    else:
        want_steps = 3 if B >= 3 else 1
    max_bt = min(max_bt, max(1, B // max(1, want_steps)))

    bt = 1
    for d in range(1, B + 1):
        if B % d == 0 and d <= max_bt:
            bt = d
    return bt


def se_layer(x, w1, b1, w2, b2, *, vmem_budget_bytes=None):
    """x: (B, C, H, W). Returns x * sigmoid(fc(relu(fc(avgpool(x))))) as NCHW."""
    B, C, H, W = x.shape
    HW = H * W
    hidden = w1.shape[1]
    elt = jnp.dtype(x.dtype).itemsize

    budget, num_tc = _tpu_generation_params()
    if vmem_budget_bytes is not None:
        budget = int(vmem_budget_bytes)

    # NCHW -> (B, C, HW): free reshape (contiguous, no data movement).
    x_flat = x.reshape(B, C, HW)
    b1_2d = b1.reshape(1, hidden)
    b2_2d = b2.reshape(1, C)

    bt = _pick_block_batch(B, C, HW, elt, budget, num_tc)
    grid = (B // bt,)

    # Memory-bound custom call: read x once, write out once, tiny FC weights.
    w_bytes = (w1.size * jnp.dtype(w1.dtype).itemsize
               + b1.size * jnp.dtype(b1.dtype).itemsize
               + w2.size * jnp.dtype(w2.dtype).itemsize
               + b2.size * jnp.dtype(b2.dtype).itemsize)
    bytes_accessed = 2 * B * C * HW * elt + w_bytes
    flops = B * (2 * C * HW + 4 * C * hidden)      # pool + scale, two FCs
    cost = pl.CostEstimate(flops=int(flops),
                           transcendentals=int(B * C),
                           bytes_accessed=int(bytes_accessed))

    out_flat = pl.pallas_call(
        se_kernel,
        out_shape=jax.ShapeDtypeStruct((B, C, HW), x.dtype),
        grid_spec=pltpu.PrefetchScalarGridSpec(
            num_scalar_prefetch=0,
            grid=grid,
            in_specs=[
                pl.BlockSpec((bt, C, HW), lambda b: (b, 0, 0)),   # x block
                pl.BlockSpec((C, hidden), lambda b: (0, 0)),      # W1 (full)
                pl.BlockSpec((1, hidden), lambda b: (0, 0)),      # b1 (full)
                pl.BlockSpec((hidden, C), lambda b: (0, 0)),      # W2 (full)
                pl.BlockSpec((1, C), lambda b: (0, 0)),           # b2 (full)
            ],
            out_specs=pl.BlockSpec((bt, C, HW), lambda b: (b, 0, 0)),
        ),
        compiler_params=pltpu.CompilerParams(
            dimension_semantics=("parallel",),
            vmem_limit_bytes=int(budget),
        ),
        cost_estimate=cost,
    )(x_flat, w1, b1_2d, w2, b2_2d)

    # (B, C, HW) -> NCHW: free reshape, no transpose.
    return out_flat.reshape(B, C, H, W)


def se_layer_ref(x, w1, b1, w2, b2):
    """Pure-JAX reference matching the PyTorch forward."""
    y = jnp.mean(x, axis=(2, 3))                   # (B, C)
    y = jnp.maximum(y @ w1 + b1, 0.0)              # (B, hidden)
    y = jax.nn.sigmoid(y @ w2 + b2)                # (B, C)
    return x * y[:, :, None, None]


if __name__ == "__main__":
    # Small shapes consistent with SELayer(channels=4, r=2) on a (2,4,16,16) input.
    B, C, H, W = 2, 4, 16, 16
    r = 2
    hidden = C // r

    key = jax.random.PRNGKey(0)
    kx, k1, kb1, k2, kb2 = jax.random.split(key, 5)

    x = jax.random.normal(kx, (B, C, H, W), dtype=jnp.float32)

    # PyTorch Linear stores weight as (out, in); here pre-transposed to (in, out)
    # so the kernel computes y @ W.
    w1 = jax.random.normal(k1, (C, hidden), dtype=jnp.float32) * 0.5
    b1 = jax.random.normal(kb1, (hidden,), dtype=jnp.float32) * 0.1
    w2 = jax.random.normal(k2, (hidden, C), dtype=jnp.float32) * 0.5
    b2 = jax.random.normal(kb2, (C,), dtype=jnp.float32) * 0.1

    out = se_layer(x, w1, b1, w2, b2)
    jax.block_until_ready(out)

    ref = se_layer_ref(x, w1, b1, w2, b2)
    assert out.shape == (B, C, H, W)
    assert jnp.allclose(out, ref, atol=1e-5, rtol=1e-5), "mismatch vs reference"

    print("KERNEL_OK")
</pallas_src>

<mosaic_0001>
module attributes {stable_mosaic.version = 11 : i64} {
  func.func @se_kernel(%arg0: i32, %arg1: memref<2x4x256xf32, #tpu.memory_space<vmem>>, %arg2: memref<4x2xf32, #tpu.memory_space<vmem>>, %arg3: memref<1x2xf32, #tpu.memory_space<vmem>>, %arg4: memref<2x4xf32, #tpu.memory_space<vmem>>, %arg5: memref<1x4xf32, #tpu.memory_space<vmem>>, %arg6: memref<2x4x256xf32, #tpu.memory_space<vmem>>) attributes {dimension_semantics = [#tpu.dimension_semantics<parallel>], iteration_bounds = array<i64: 1>, scalar_prefetch = 0 : i64, scratch_operands = 0 : i64, tpu.core_type = #tpu.core_type<tc>, window_params = [{transform_indices = @transform_0, window_bounds = array<i64: 2, 4, 256>}, {pipeline_mode = #tpu.pipeline_mode<synchronous>, transform_indices = @transform_1, window_bounds = array<i64: 4, 2>}, {pipeline_mode = #tpu.pipeline_mode<synchronous>, transform_indices = @transform_2, window_bounds = array<i64: 1, 2>}, {pipeline_mode = #tpu.pipeline_mode<synchronous>, transform_indices = @transform_3, window_bounds = array<i64: 2, 4>}, {pipeline_mode = #tpu.pipeline_mode<synchronous>, transform_indices = @transform_4, window_bounds = array<i64: 1, 4>}, {transform_indices = @transform_5, window_bounds = array<i64: 2, 4, 256>}]} {
    %c0 = arith.constant 0 : index
    %c0_0 = arith.constant 0 : index
    %c0_1 = arith.constant 0 : index
    %0 = vector.load %arg1[%c0, %c0_0, %c0_1] : memref<2x4x256xf32, #tpu.memory_space<vmem>>, vector<2x4x256xf32>
    %cst = arith.constant dense<0.000000e+00> : vector<2x4xf32>
    %1 = vector.multi_reduction <add>, %0, %cst [2] : vector<2x4x256xf32> to vector<2x4xf32>
    %cst_2 = arith.constant 2.560000e+02 : f32
    %2 = vector.broadcast %cst_2 : f32 to vector<2x4xf32>
    %3 = arith.divf %1, %2 : vector<2x4xf32>
    %c0_3 = arith.constant 0 : index
    %c0_4 = arith.constant 0 : index
    %4 = vector.load %arg2[%c0_3, %c0_4] : memref<4x2xf32, #tpu.memory_space<vmem>>, vector<4x2xf32>
    %cst_5 = arith.constant dense<0.000000e+00> : vector<2x2xf32>
    %5 = tpu.matmul %3, %4, %cst_5 {dimension_numbers = #tpu.dot_dimension_numbers<[1], [0], [0], [1], [0, 0, 1, 1], [], []>} : vector<2x4xf32>, vector<4x2xf32>, vector<2x2xf32> -> vector<2x2xf32>
    %c0_6 = arith.constant 0 : index
    %c0_7 = arith.constant 0 : index
    %6 = vector.load %arg3[%c0_6, %c0_7] : memref<1x2xf32, #tpu.memory_space<vmem>>, vector<1x2xf32>
    %7 = vector.broadcast %6 : vector<1x2xf32> to vector<2x2xf32>
    %8 = arith.addf %5, %7 : vector<2x2xf32>
    %cst_8 = arith.constant 0.000000e+00 : f32
    %9 = vector.broadcast %cst_8 : f32 to vector<2x2xf32>
    %10 = arith.maximumf %8, %9 : vector<2x2xf32>
    %c0_9 = arith.constant 0 : index
    %c0_10 = arith.constant 0 : index
    %11 = vector.load %arg4[%c0_9, %c0_10] : memref<2x4xf32, #tpu.memory_space<vmem>>, vector<2x4xf32>
    %cst_11 = arith.constant dense<0.000000e+00> : vector<2x4xf32>
    %12 = tpu.matmul %10, %11, %cst_11 {dimension_numbers = #tpu.dot_dimension_numbers<[1], [0], [0], [1], [0, 0, 1, 1], [], []>} : vector<2x2xf32>, vector<2x4xf32>, vector<2x4xf32> -> vector<2x4xf32>
    %c0_12 = arith.constant 0 : index
    %c0_13 = arith.constant 0 : index
    %13 = vector.load %arg5[%c0_12, %c0_13] : memref<1x4xf32, #tpu.memory_space<vmem>>, vector<1x4xf32>
    %14 = vector.broadcast %13 : vector<1x4xf32> to vector<2x4xf32>
    %15 = arith.addf %12, %14 : vector<2x4xf32>
    %16 = arith.negf %15 : vector<2x4xf32>
    %17 = math.exp %16 : vector<2x4xf32>
    %cst_14 = arith.constant 1.000000e+00 : f32
    %18 = vector.broadcast %cst_14 : f32 to vector<2x4xf32>
    %19 = arith.addf %18, %17 : vector<2x4xf32>
    %20 = arith.divf %18, %19 : vector<2x4xf32>
    %21 = vector.shape_cast %20 : vector<2x4xf32> to vector<2x4x1xf32>
    %22 = vector.broadcast %21 : vector<2x4x1xf32> to vector<2x4x256xf32>
    %23 = arith.mulf %0, %22 : vector<2x4x256xf32>
    %c0_15 = arith.constant 0 : index
    %c0_16 = arith.constant 0 : index
    %c0_17 = arith.constant 0 : index
    %24 = vector.load %arg6[%c0_15, %c0_16, %c0_17] : memref<2x4x256xf32, #tpu.memory_space<vmem>>, vector<2x4x256xf32>
    tpu.vector_store %arg6[%c0_15, %c0_16, %c0_17], %23 {strides = array<i32>} : memref<2x4x256xf32, #tpu.memory_space<vmem>>, vector<2x4x256xf32>,
    return
  }
  func.func @transform_0(%arg0: i32) -> (i32, i32, i32) {
    %c0_i32 = arith.constant 0 : i32
    %c0_i32_0 = arith.constant 0 : i32
    %c0_i32_1 = arith.constant 0 : i32
    return %arg0, %c0_i32, %c0_i32_0 : i32, i32, i32
  }
  func.func @transform_1(%arg0: i32) -> (i32, i32) {
    %c0_i32 = arith.constant 0 : i32
    %c0_i32_0 = arith.constant 0 : i32
    %c0_i32_1 = arith.constant 0 : i32
    return %c0_i32, %c0_i32_0 : i32, i32
  }
  func.func @transform_2(%arg0: i32) -> (i32, i32) {
    %c0_i32 = arith.constant 0 : i32
    %c0_i32_0 = arith.constant 0 : i32
    %c0_i32_1 = arith.constant 0 : i32
    return %c0_i32, %c0_i32_0 : i32, i32
  }
  func.func @transform_3(%arg0: i32) -> (i32, i32) {
    %c0_i32 = arith.constant 0 : i32
    %c0_i32_0 = arith.constant 0 : i32
    %c0_i32_1 = arith.constant 0 : i32
    return %c0_i32, %c0_i32_0 : i32, i32
  }
  func.func @transform_4(%arg0: i32) -> (i32, i32) {
    %c0_i32 = arith.constant 0 : i32
    %c0_i32_0 = arith.constant 0 : i32
    %c0_i32_1 = arith.constant 0 : i32
    return %c0_i32, %c0_i32_0 : i32, i32
  }
  func.func @transform_5(%arg0: i32) -> (i32, i32, i32) {
    %c0_i32 = arith.constant 0 : i32
    %c0_i32_0 = arith.constant 0 : i32
    %c0_i32_1 = arith.constant 0 : i32
    return %arg0, %c0_i32, %c0_i32_0 : i32, i32, i32
  }
}

</mosaic_0001>

<llo_original>
// kernel: tpu_custom_call.1
$region0: #{tpu_custom_call.1}
  #allocation0 [shape = 'u32[]', space=smem, size = 0x4, offset = 0x4, fixed_abs, tag = 'smem constant byte address 0x4 - core index']
  #allocation1 [shape = 'u32[72,128]{1,0:T(1,128)}', space=vmem, size = 0x9000, scoped, tag = 'internal scratch']
  %s0 = inlined_call_operand.hbm [shape: f32[2,4,256], index: 0, kind: input, shape index: {}]
  %s1 = inlined_call_operand.vmem [shape: f32[4,2], index: 1, kind: input, shape index: {}]
  %s2 = inlined_call_operand.vmem [shape: f32[1,2], index: 2, kind: input, shape index: {}]
  %s3 = inlined_call_operand.vmem [shape: f32[2,4], index: 3, kind: input, shape index: {}]
  %s4 = inlined_call_operand.vmem [shape: f32[1,4], index: 4, kind: input, shape index: {}]
  %s5 = inlined_call_operand.hbm [shape: f32[2,4,256], index: 5, kind: output, shape index: {}]
  %s6 = sld [smem:[#allocation0]]
  $region34: #{tpu_custom_call.1} parent=0
    _
  %s8 = ssub.s32 1, %s6
  %s9 = scalar_select 0, %s8, %s6
  $region1: #{tpu_custom_call.1} parent=0
    #allocation2 [shape = 'u8[8192]{0}', space=vmem, size = 0x2000, scoped, tag = 'input window, operand 0, single buffered']
    #allocation3 [shape = 's32[1]{0}', space=sflag, size = 0x4, scoped, tag = 'scoped memory for tpu_custom_call.1']
    #allocation4 [shape = 's32[1]{0}', space=sflag, size = 0x4, scoped, tag = 'scoped memory for tpu_custom_call.1']
    #allocation5 [shape = 'u8[8192]{0}', space=vmem, size = 0x2000, scoped, tag = 'output window, operand 0, single buffered']
    %10 = vsyncpa [#allocation3], 0
    %11 = vsyncpa [#allocation4], 0
    // Predicated region
    $region2: #{tpu_custom_call.1} parent=1 // pred_check
      _
    $region3: #{tpu_custom_call.1} parent=1 // pred_check_branch
      %13 = sbr.rel (0) target = $region5
    $region4: #{tpu_custom_call.1} parent=1 // pred_region
      %15 = vsyncadd [#allocation3], 0
      %s16 = sshll.u32 %s0, 4
      %s17 = int_to_ptr.hbm [resolvable:$true] %s16
      %s18 = sshll.u32 [#allocation2], 4
      %s19 = int_to_ptr.vmem [resolvable:$true] %s18
      %24 = dma.hbm_to_vmem [thread:$0]  %s17, 256, %s19, [#allocation3], 128, 128, 8
    $region5: #{tpu_custom_call.1} parent=1 // pred_fallthru
      _
    // Predicated region
    $region6: #{tpu_custom_call.1} parent=1 // pred_check
      _
    $region7: #{tpu_custom_call.1} parent=1 // pred_check_branch
      %26 = sbr.rel (0) target = $region9
    $region8: #{tpu_custom_call.1} parent=1 // pred_region
      _
    $region9: #{tpu_custom_call.1} parent=1 // pred_fallthru
      _
    // Predicated region
    $region10: #{tpu_custom_call.1} parent=1 // pred_check
      _
    $region11: #{tpu_custom_call.1} parent=1 // pred_check_branch
      %28 = sbr.rel (0) target = $region13
    $region12: #{tpu_custom_call.1} parent=1 // pred_region
      _
    $region13: #{tpu_custom_call.1} parent=1 // pred_fallthru
      _
    // Predicated region
    $region14: #{tpu_custom_call.1} parent=1 // pred_check
      _
    $region15: #{tpu_custom_call.1} parent=1 // pred_check_branch
      %30 = sbr.rel (0) target = $region17
    $region16: #{tpu_custom_call.1} parent=1 // pred_region
      _
    $region17: #{tpu_custom_call.1} parent=1 // pred_fallthru
      _
    // Predicated region
    $region18: #{tpu_custom_call.1} parent=1 // pred_check
      _
    $region19: #{tpu_custom_call.1} parent=1 // pred_check_branch
      %32 = sbr.rel (0) target = $region21
    $region20: #{tpu_custom_call.1} parent=1 // pred_region
      _
    $region21: #{tpu_custom_call.1} parent=1 // pred_fallthru
      _
    // Predicated region
    $region22: #{tpu_custom_call.1} parent=1 // pred_check
      _
    $region23: #{tpu_custom_call.1} parent=1 // pred_check_branch
      %34 = sbr.rel (0) target = $region25
    $region24: #{tpu_custom_call.1} parent=1 // pred_region
      %36 = dma.done [#allocation3], 256
    $region25: #{tpu_custom_call.1} parent=1 // pred_fallthru
      _
    %v37 = vld [vmem:[#allocation2] sm:$0xff]
    %v38 = vld [vmem:[#allocation2 + $0x8] sm:$0xff]
    %41 = vst [vmem:[#allocation1] ss:$2 sm:$0xff] %v37
    %v42 = vld.sshfl [vmem:[#allocation1] sm:$0xff pattern:$0x75316420]
    %v43 = vld.sshfl [vmem:[#allocation1 + $0x8] sm:$0xff pattern:$0x75316420]
    %s44 = scalar_lea.vmem [#allocation1], 16
    %45 = vst [vmem:[%s44] ss:$2 sm:$0xff] %v38
    %v46 = vld.sshfl [vmem:[#allocation1 + $0x10] sm:$0xff pattern:$0x75316420]
    %v47 = vld.sshfl [vmem:[#allocation1 + $0x18] sm:$0xff pattern:$0x75316420]
    %vm52 = vcmask 1043456
    %v53 = vsel %vm52, %v42, 0.0
    %v54 = vsel %vm52, %v43, 0.0
    %v55 = vadd.f32 %v53, %v54
    %56 = vadd.xlane.f32.xlu0 %v55
    %v57 = vpop.xlane.xlu0 %56
    %v58 = vsel %vm52, %v46, 0.0
    %v59 = vsel %vm52, %v47, 0.0
    %v60 = vadd.f32 %v58, %v59
    %61 = vadd.xlane.f32.xlu0 %v60
    %v62 = vpop.xlane.xlu0 %61
    %v63 = vrcp.pop 256.0
    %v64 = vmul.f32 256.0, %v63
    %v65 = vsub.f32 1.0, %v64
    %v66 = vmul.f32 %v63, %v65
    %v67 = vadd.f32 %v63, %v66
    %vm68 = vweird.f32 %v63
    %v69 = vsel %vm68, %v63, %v67
    %v70 = vmul.f32 %v57, %v69
    %v71 = vmul.f32 %v62, %v69
    %v72 = vld [vmem:[%s1] sm:$0xf]
    %v73 = vld [vmem:[%s2] sm:$0x1]
    %v75 = vperm.slane %v73, 0
    %v79 = vlaneseq
    %v80 = vand.u32 %v79, 127
    %v81 = vperm.slane %v70, %v80
    %v82 = vperm.slane %v71, %v80
    %vm83 = vcmask 1041409
    %v84 = vsel %vm83, %v82, %v81
    %vm85 = vcmask 31744
    %v86 = vsel %vm85, %v84, 0
    %v89 = vsel %vm52, %v72, 0
    %91 = vmatpush.msra.mxu0 0.0
    %92 = vmatpush.msra.mxu0 0.0
    %93 = vmatpush.msra.mxu0 0.0
    %94 = vmatpush.msra.mxu0 0.0
    %95 = vmatpush.msra.mxu0 0.0
    %96 = vmatpush.msra.mxu0 0.0
    %97 = vmatpush.msra.mxu0 0.0
    %98 = vmatpush.msra.mxu0 0.0
    %99 = vmatpush.msra.mxu0 0.0
    %100 = vmatpush.msra.mxu0 0.0
    %101 = vmatpush.msra.mxu0 0.0
    %102 = vmatpush.msra.mxu0 0.0
    %103 = vmatpush.msra.mxu0 0.0
    %104 = vmatpush.msra.mxu0 0.0
    %105 = vmatpush.msra.mxu0 0.0
    %106 = vmatpush.msra.mxu0 %v89
    %107 = vmatmul.f32.gmra.mxu0 %v86
    %v108 = vpop.f32.mrf.mxu0
    %v109 = vadd.f32 %v75, %v108
    %110 = vdwg.mxu0
    %v111 = vmax.f32 %v109, 0.0
    %v112 = vld [vmem:[%s3] sm:$0x3]
    %v113 = vld [vmem:[%s4] sm:$0x1]
    %v115 = vperm.slane %v113, 0
    %vm117 = vcmask 15360
    %v119 = vsel %vm117, %v111, 0
    %vm121 = vcmask 1041408
    %v123 = vsel %vm121, %v112, 0
    %125 = vmatpush.msra.mxu0 0.0
    %126 = vmatpush.msra.mxu0 0.0
    %127 = vmatpush.msra.mxu0 0.0
    %128 = vmatpush.msra.mxu0 0.0
    %129 = vmatpush.msra.mxu0 0.0
    %130 = vmatpush.msra.mxu0 0.0
    %131 = vmatpush.msra.mxu0 0.0
    %132 = vmatpush.msra.mxu0 0.0
    %133 = vmatpush.msra.mxu0 0.0
    %134 = vmatpush.msra.mxu0 0.0
    %135 = vmatpush.msra.mxu0 0.0
    %136 = vmatpush.msra.mxu0 0.0
    %137 = vmatpush.msra.mxu0 0.0
    %138 = vmatpush.msra.mxu0 0.0
    %139 = vmatpush.msra.mxu0 0.0
    %140 = vmatpush.msra.mxu0 %v123
    %141 = vmatmul.f32.gmra.mxu0 %v119
    %v142 = vpop.f32.mrf.mxu0
    %v143 = vadd.f32 %v115, %v142
    %144 = vdwg.mxu0
    %v145 = vxor.u32 %v143, 2147483648
    %v146 = vmul.f32 %v145, 1.442695
    %v147 = vpow.pop %v146
    %v148 = vadd.f32 %v147, 1.0
    %v149 = vrcp.pop %v148
    %v150 = vmul.f32 %v148, %v149
    %v151 = vsub.f32 1.0, %v150
    %v152 = vmul.f32 %v149, %v151
    %v153 = vadd.f32 %v149, %v152
    %vm154 = vweird.f32 %v148
    %vm155 = vweird.f32 %v149
    %vm156 = vmor %vm154, %vm155
    %v157 = vsel %vm156, %v149, %v153
    %v158 = vand.u32 2147483647, %v148
    %vm159 = vcmp.eq.f32.partialorder %v158, 8.507059e+37
    %v160 = vand.u32 %v148, 2147483648
    %v161 = vor.u32 1.1754944e-38, %v160
    %v162 = vsel %vm159, %v161, %v157
    %v163 = vmul.f32 1.0, %v162
    %v164 = vperm.slane %v163, 0
    %v165 = vlaneseq
    %v166 = vshrl.u32 %v165, 7
    %168 = vset.pattern.permute.xlu0 %v166
    %169 = vperm.xlu0 %168, %v164
    %v170 = vpop.permute.xlu0 %169
    %v171 = vperm.slane %v163, 1
    %v172 = vlaneseq
    %v173 = vshrl.u32 %v172, 7
    %175 = vset.pattern.permute.xlu0 %v173
    %176 = vperm.xlu0 %175, %v171
    %v177 = vpop.permute.xlu0 %176
    %v181 = vunpack.c.l.s4 839922192
    %v182 = vunpack.c.0.s8 %v181
    %v183 = vperm.slane %v170, %v182
    %v185 = vunpack.c.l.s4 839922192
    %v186 = vunpack.c.0.s8 %v185
    %v187 = vperm.slane %v177, %v186
    %v190 = vmul.f32 %v37, %v183
    %v191 = vmul.f32 %v38, %v187
    %192 = vst [vmem:[#allocation5] sm:$0xff] %v190
    %193 = vst [vmem:[#allocation5 + $0x8] sm:$0xff] %v191
    // Predicated region
    $region26: #{tpu_custom_call.1} parent=1 // pred_check
      _
    $region27: #{tpu_custom_call.1} parent=1 // pred_check_branch
      %195 = sbr.rel (0) target = $region29
    $region28: #{tpu_custom_call.1} parent=1 // pred_region
      %197 = vsyncadd [#allocation4], 0
      %s198 = sshll.u32 [#allocation5], 4
      %s199 = int_to_ptr.vmem [resolvable:$true] %s198
      %s200 = sshll.u32 %s5, 4
      %s201 = int_to_ptr.hbm [resolvable:$true] %s200
      %206 = dma.vmem_to_hbm [thread:$0]  %s199, 256, %s201, [#allocation4], 128, 128, 8
    $region29: #{tpu_custom_call.1} parent=1 // pred_fallthru
      _
    // Predicated region
    $region30: #{tpu_custom_call.1} parent=1 // pred_check
      _
    $region31: #{tpu_custom_call.1} parent=1 // pred_check_branch
      %208 = sbr.rel (0) target = $region33
    $region32: #{tpu_custom_call.1} parent=1 // pred_region
      %210 = dma.done [#allocation4], 256
    $region33: #{tpu_custom_call.1} parent=1 // pred_fallthru
      _
    %211 = vsyncpa [#allocation3], 1
    %212 = vsyncpa [#allocation4], 1

</llo_original>
